<compile_context>
chip_gen: v7x
topology: tpu7x:2x2x1
jax: 0.10.0
libtpu: 0.0.40
codegen_flags: <defaults>
</compile_context>

<pallas_src>
import jax
import jax.numpy as jnp
from jax.experimental import pallas as pl
from jax.experimental.pallas import tpu as pltpu


def gcn_kernel(x_ref, w1t_ref, b1_ref, w2_ref, o_ref, h_ref):
    # x_ref:   (Bt, S, N)      block of images, node dim on lanes
    # w1t_ref: (N, N)          W1^T - I   ('-x' folded into the weight)
    # b1_ref:  (1, N)          conv1 bias (f32)
    # w2_ref:  (S, S)          conv2 weight
    # o_ref:   (Bt, S, N)      relu(W2 @ (x @ (W1^T - I) + b1))
    # h_ref:   (S, Bt*N)       VMEM scratch holding h in S-major layout
    Bt, S, N = x_ref.shape

    # ---- conv1 over the node dim: ONE (Bt*S, N) x (N, N) matmul -------------
    # (Bt, S, N) -> (Bt*S, N) is a layout-free leading-dim merge (S % 8 == 0).
    x2 = x_ref[...].reshape(Bt * S, N)
    h2 = jnp.dot(x2, w1t_ref[...], preferred_element_type=jnp.float32)
    h2 = h2 + b1_ref[...]                                  # (Bt*S, N) f32

    # ---- rearrange to S-major (S, Bt*N) via tile-aligned static slices ------
    # Row offsets are multiples of S (mult. of 8) and lane offsets multiples of
    # N (mult. of 128), so every copy is an unmasked, tile-aligned store.
    for b in range(Bt):
        h_ref[:, b * N:(b + 1) * N] = h2[b * S:(b + 1) * S, :].astype(h_ref.dtype)

    # ---- conv2 over the state dim: ONE wide (S, S) x (S, Bt*N) matmul -------
    out_wide = jnp.dot(w2_ref[...], h_ref[...],
                       preferred_element_type=jnp.float32)
    out_wide = jnp.maximum(out_wide, 0.0)                  # ReLU

    # ---- scatter back to the (Bt, S, N) output block ------------------------
    for b in range(Bt):
        o_ref[b, :, :] = out_wide[:, b * N:(b + 1) * N].astype(o_ref.dtype)


def _pick_block_b(B, S, N, compute_itemsize, *, max_block_b=8,
                  vmem_budget_bytes=24 << 20):
    """Largest divisor of B (<= max_block_b) whose pipeline footprint fits."""
    best = 1
    for cand in range(1, min(B, max_block_b) + 1):
        if B % cand:
            continue
        # 2x double-buffered input + 2x double-buffered f32 output + scratch.
        footprint = cand * S * N * (2 * compute_itemsize + 2 * 4 + compute_itemsize)
        if footprint <= vmem_budget_bytes:
            best = cand
    return best


def gcn_forward(x, w1, b1, w2, *, block_b=None, compute_dtype=jnp.float32):
    """x: (B, S, N); w1: (N, N); b1: (N,); w2: (S, S).

    Returns (B, S, N) f32, identical to the PyTorch GCN.forward.
    `compute_dtype=jnp.bfloat16` halves HBM traffic and uses the bf16 MXU path
    (f32 accumulation, f32 output); keep f32 if the numerics budget is tight.
    """
    B, S, N = x.shape
    out_dtype = x.dtype
    # TODO(synk): pad S to a multiple of 8 / N to a multiple of 128 in the
    # wrapper for non-conforming shapes instead of asserting.
    assert S % 8 == 0, f"num_state (S={S}) must be a multiple of 8"
    assert N % 128 == 0, f"num_node (N={N}) must be a multiple of 128"

    compute_itemsize = jnp.dtype(compute_dtype).itemsize
    if block_b is None:
        # Auto pick; for large B this keeps grid >= 2 (keeps both v7x TCs busy).
        block_b = _pick_block_b(B, S, N, compute_itemsize)
    assert B % block_b == 0, "block_b must divide the batch dim"
    grid = (B // block_b,)

    # Fold the '-x' into W1 once (hoist out of the per-call path when weights
    # are static) and cast MXU inputs to the compute dtype.
    w1t = (w1.T - jnp.eye(N, dtype=w1.dtype)).astype(compute_dtype)   # (N, N)
    w2c = w2.astype(compute_dtype)                                    # (S, S)
    xc = x.astype(compute_dtype)                                      # (B, S, N)
    b1_2d = b1.reshape(1, N).astype(jnp.float32)                      # f32 bias

    # Explicit VMEM budget: 2x buffered in/out blocks + scratch + resident
    # weights, with margin; capped at 64 MiB so it is valid on v7x too.
    in_block = block_b * S * N * compute_itemsize
    out_block = block_b * S * N * jnp.dtype(out_dtype).itemsize
    scratch_bytes = S * block_b * N * compute_itemsize
    weight_bytes = (N * N + S * S) * compute_itemsize + N * 4
    vmem_limit = 2 * in_block + 2 * out_block + scratch_bytes + weight_bytes
    vmem_limit = int(min(max(vmem_limit + (4 << 20), 16 << 20), 64 << 20))

    cost = pl.CostEstimate(
        flops=2 * B * S * N * (N + S),
        transcendentals=0,
        bytes_accessed=B * S * N * (compute_itemsize + jnp.dtype(out_dtype).itemsize)
        + weight_bytes,
    )

    return pl.pallas_call(
        gcn_kernel,
        out_shape=jax.ShapeDtypeStruct((B, S, N), out_dtype),
        grid=grid,
        in_specs=[
            pl.BlockSpec((block_b, S, N), lambda b: (b, 0, 0)),
            pl.BlockSpec((N, N), lambda b: (0, 0)),   # W1^T - I, VMEM-resident
            pl.BlockSpec((1, N), lambda b: (0, 0)),   # b1,       VMEM-resident
            pl.BlockSpec((S, S), lambda b: (0, 0)),   # W2,       VMEM-resident
        ],
        out_specs=pl.BlockSpec((block_b, S, N), lambda b: (b, 0, 0)),
        scratch_shapes=[pltpu.VMEM((S, block_b * N), compute_dtype)],
        compiler_params=pltpu.CompilerParams(
            dimension_semantics=("parallel",),
            vmem_limit_bytes=vmem_limit,
        ),
        cost_estimate=cost,
    )(xc, w1t, b1_2d, w2c)


def gcn_ref(x, w1, b1, w2):
    """Pure-JAX reference matching the PyTorch forward exactly."""
    hp = jax.lax.Precision.HIGHEST
    h = jnp.einsum("bsn,mn->bsm", x, w1, precision=hp) + b1   # conv1 over node dim
    h = h - x
    out = jnp.einsum("os,bsn->bon", w2, h, precision=hp)      # conv2 over state dim
    return jnp.maximum(out, 0.0)


if __name__ == "__main__":
    # Small shapes consistent with the module: x is (B, num_state, num_node).
    # N = 128 keeps the node dim lane-dense; S = 64 is a multiple of 8.
    B, S, N = 8, 64, 128   # batch, num_state, num_node

    key = jax.random.PRNGKey(0)
    kx, kw1, kb1, kw2 = jax.random.split(key, 4)
    x = jax.random.normal(kx, (B, S, N), dtype=jnp.float32)
    # Conv1d kernel_size=1 weights collapse to dense matrices.
    w1 = jax.random.normal(kw1, (N, N), dtype=jnp.float32) * (1.0 / jnp.sqrt(N))
    b1 = jax.random.normal(kb1, (N,), dtype=jnp.float32) * 0.1
    w2 = jax.random.normal(kw2, (S, S), dtype=jnp.float32) * (1.0 / jnp.sqrt(S))

    ref = gcn_ref(x, w1, b1, w2)

    # f32 path (block_b=4 -> grid of 2, exercises the pipelined batch grid).
    out = gcn_forward(x, w1, b1, w2, block_b=4, compute_dtype=jnp.float32)
    out = jax.block_until_ready(out)
    assert out.shape == (B, S, N)
    assert jnp.allclose(out, ref, atol=1e-3, rtol=1e-3), "f32 mismatch vs reference"

    # bf16 MXU path (f32 accumulation), looser numerical tolerance.
    out_bf16 = gcn_forward(x, w1, b1, w2, compute_dtype=jnp.bfloat16)
    out_bf16 = jax.block_until_ready(out_bf16)
    assert out_bf16.shape == (B, S, N)
    assert jnp.allclose(out_bf16, ref, atol=0.15, rtol=0.05), "bf16 mismatch vs reference"

    print("KERNEL_OK")
</pallas_src>

<mosaic_0001>
module attributes {stable_mosaic.version = 11 : i64} {
  func.func @gcn_kernel(%arg0: i32, %arg1: memref<4x64x128xf32, #tpu.memory_space<vmem>>, %arg2: memref<128x128xf32, #tpu.memory_space<vmem>>, %arg3: memref<1x128xf32, #tpu.memory_space<vmem>>, %arg4: memref<64x64xf32, #tpu.memory_space<vmem>>, %arg5: memref<4x64x128xf32, #tpu.memory_space<vmem>>, %arg6: memref<64x512xf32, #tpu.memory_space<vmem>>) attributes {dimension_semantics = [#tpu.dimension_semantics<parallel>], iteration_bounds = array<i64: 2>, scalar_prefetch = 0 : i64, scratch_operands = 1 : i64, tpu.core_type = #tpu.core_type<tc>, window_params = [{transform_indices = @transform_0, window_bounds = array<i64: 4, 64, 128>}, {pipeline_mode = #tpu.pipeline_mode<synchronous>, transform_indices = @transform_1, window_bounds = array<i64: 128, 128>}, {pipeline_mode = #tpu.pipeline_mode<synchronous>, transform_indices = @transform_2, window_bounds = array<i64: 1, 128>}, {pipeline_mode = #tpu.pipeline_mode<synchronous>, transform_indices = @transform_3, window_bounds = array<i64: 64, 64>}, {transform_indices = @transform_4, window_bounds = array<i64: 4, 64, 128>}]} {
    %c0 = arith.constant 0 : index
    %c0_0 = arith.constant 0 : index
    %c0_1 = arith.constant 0 : index
    %0 = vector.load %arg1[%c0, %c0_0, %c0_1] : memref<4x64x128xf32, #tpu.memory_space<vmem>>, vector<4x64x128xf32>
    %1 = vector.shape_cast %0 : vector<4x64x128xf32> to vector<256x128xf32>
    %c0_2 = arith.constant 0 : index
    %c0_3 = arith.constant 0 : index
    %2 = vector.load %arg2[%c0_2, %c0_3] : memref<128x128xf32, #tpu.memory_space<vmem>>, vector<128x128xf32>
    %cst = arith.constant dense<0.000000e+00> : vector<256x128xf32>
    %3 = tpu.matmul %1, %2, %cst {dimension_numbers = #tpu.dot_dimension_numbers<[1], [0], [0], [1], [0, 0, 1, 1], [], []>} : vector<256x128xf32>, vector<128x128xf32>, vector<256x128xf32> -> vector<256x128xf32>
    %c0_4 = arith.constant 0 : index
    %c0_5 = arith.constant 0 : index
    %4 = vector.load %arg3[%c0_4, %c0_5] : memref<1x128xf32, #tpu.memory_space<vmem>>, vector<1x128xf32>
    %5 = vector.broadcast %4 : vector<1x128xf32> to vector<256x128xf32>
    %6 = arith.addf %3, %5 : vector<256x128xf32>
    %7 = vector.extract_strided_slice %6 {offsets = [0, 0], sizes = [64, 128], strides = [1, 1]} : vector<256x128xf32> to vector<64x128xf32>
    %c0_6 = arith.constant 0 : index
    %c0_7 = arith.constant 0 : index
    %8 = vector.load %arg6[%c0_6, %c0_7] : memref<64x512xf32, #tpu.memory_space<vmem>>, vector<64x128xf32>
    tpu.vector_store %arg6[%c0_6, %c0_7], %7 {strides = array<i32>} : memref<64x512xf32, #tpu.memory_space<vmem>>, vector<64x128xf32>,
    %9 = vector.extract_strided_slice %6 {offsets = [64, 0], sizes = [64, 128], strides = [1, 1]} : vector<256x128xf32> to vector<64x128xf32>
    %c0_8 = arith.constant 0 : index
    %c128 = arith.constant 128 : index
    %10 = vector.load %arg6[%c0_8, %c128] : memref<64x512xf32, #tpu.memory_space<vmem>>, vector<64x128xf32>
    tpu.vector_store %arg6[%c0_8, %c128], %9 {strides = array<i32>} : memref<64x512xf32, #tpu.memory_space<vmem>>, vector<64x128xf32>,
    %11 = vector.extract_strided_slice %6 {offsets = [128, 0], sizes = [64, 128], strides = [1, 1]} : vector<256x128xf32> to vector<64x128xf32>
    %c0_9 = arith.constant 0 : index
    %c256 = arith.constant 256 : index
    %12 = vector.load %arg6[%c0_9, %c256] : memref<64x512xf32, #tpu.memory_space<vmem>>, vector<64x128xf32>
    tpu.vector_store %arg6[%c0_9, %c256], %11 {strides = array<i32>} : memref<64x512xf32, #tpu.memory_space<vmem>>, vector<64x128xf32>,
    %13 = vector.extract_strided_slice %6 {offsets = [192, 0], sizes = [64, 128], strides = [1, 1]} : vector<256x128xf32> to vector<64x128xf32>
    %c0_10 = arith.constant 0 : index
    %c384 = arith.constant 384 : index
    %14 = vector.load %arg6[%c0_10, %c384] : memref<64x512xf32, #tpu.memory_space<vmem>>, vector<64x128xf32>
    tpu.vector_store %arg6[%c0_10, %c384], %13 {strides = array<i32>} : memref<64x512xf32, #tpu.memory_space<vmem>>, vector<64x128xf32>,
    %c0_11 = arith.constant 0 : index
    %c0_12 = arith.constant 0 : index
    %15 = vector.load %arg4[%c0_11, %c0_12] : memref<64x64xf32, #tpu.memory_space<vmem>>, vector<64x64xf32>
    %c0_13 = arith.constant 0 : index
    %c0_14 = arith.constant 0 : index
    %16 = vector.load %arg6[%c0_13, %c0_14] : memref<64x512xf32, #tpu.memory_space<vmem>>, vector<64x512xf32>
    %cst_15 = arith.constant dense<0.000000e+00> : vector<64x512xf32>
    %17 = tpu.matmul %15, %16, %cst_15 {dimension_numbers = #tpu.dot_dimension_numbers<[1], [0], [0], [1], [0, 0, 1, 1], [], []>} : vector<64x64xf32>, vector<64x512xf32>, vector<64x512xf32> -> vector<64x512xf32>
    %cst_16 = arith.constant 0.000000e+00 : f32
    %18 = vector.broadcast %cst_16 : f32 to vector<64x512xf32>
    %19 = arith.maximumf %17, %18 : vector<64x512xf32>
    %20 = vector.extract_strided_slice %19 {offsets = [0, 0], sizes = [64, 128], strides = [1, 1]} : vector<64x512xf32> to vector<64x128xf32>
    %c0_17 = arith.constant 0 : index
    %c0_18 = arith.constant 0 : index
    %c0_19 = arith.constant 0 : index
    %21 = vector.load %arg5[%c0_17, %c0_18, %c0_19] : memref<4x64x128xf32, #tpu.memory_space<vmem>>, vector<1x64x128xf32>
    %22 = vector.shape_cast %21 : vector<1x64x128xf32> to vector<64x128xf32>
    %23 = vector.shape_cast %20 : vector<64x128xf32> to vector<1x64x128xf32>
    tpu.vector_store %arg5[%c0_17, %c0_18, %c0_19], %23 {strides = array<i32>} : memref<4x64x128xf32, #tpu.memory_space<vmem>>, vector<1x64x128xf32>,
    %24 = vector.extract_strided_slice %19 {offsets = [0, 128], sizes = [64, 128], strides = [1, 1]} : vector<64x512xf32> to vector<64x128xf32>
    %c1 = arith.constant 1 : index
    %c0_20 = arith.constant 0 : index
    %c0_21 = arith.constant 0 : index
    %25 = vector.load %arg5[%c1, %c0_20, %c0_21] : memref<4x64x128xf32, #tpu.memory_space<vmem>>, vector<1x64x128xf32>
    %26 = vector.shape_cast %25 : vector<1x64x128xf32> to vector<64x128xf32>
    %27 = vector.shape_cast %24 : vector<64x128xf32> to vector<1x64x128xf32>
    tpu.vector_store %arg5[%c1, %c0_20, %c0_21], %27 {strides = array<i32>} : memref<4x64x128xf32, #tpu.memory_space<vmem>>, vector<1x64x128xf32>,
    %28 = vector.extract_strided_slice %19 {offsets = [0, 256], sizes = [64, 128], strides = [1, 1]} : vector<64x512xf32> to vector<64x128xf32>
    %c2 = arith.constant 2 : index
    %c0_22 = arith.constant 0 : index
    %c0_23 = arith.constant 0 : index
    %29 = vector.load %arg5[%c2, %c0_22, %c0_23] : memref<4x64x128xf32, #tpu.memory_space<vmem>>, vector<1x64x128xf32>
    %30 = vector.shape_cast %29 : vector<1x64x128xf32> to vector<64x128xf32>
    %31 = vector.shape_cast %28 : vector<64x128xf32> to vector<1x64x128xf32>
    tpu.vector_store %arg5[%c2, %c0_22, %c0_23], %31 {strides = array<i32>} : memref<4x64x128xf32, #tpu.memory_space<vmem>>, vector<1x64x128xf32>,
    %32 = vector.extract_strided_slice %19 {offsets = [0, 384], sizes = [64, 128], strides = [1, 1]} : vector<64x512xf32> to vector<64x128xf32>
    %c3 = arith.constant 3 : index
    %c0_24 = arith.constant 0 : index
    %c0_25 = arith.constant 0 : index
    %33 = vector.load %arg5[%c3, %c0_24, %c0_25] : memref<4x64x128xf32, #tpu.memory_space<vmem>>, vector<1x64x128xf32>
    %34 = vector.shape_cast %33 : vector<1x64x128xf32> to vector<64x128xf32>
    %35 = vector.shape_cast %32 : vector<64x128xf32> to vector<1x64x128xf32>
    tpu.vector_store %arg5[%c3, %c0_24, %c0_25], %35 {strides = array<i32>} : memref<4x64x128xf32, #tpu.memory_space<vmem>>, vector<1x64x128xf32>,
    return
  }
  func.func @transform_0(%arg0: i32) -> (i32, i32, i32) {
    %c0_i32 = arith.constant 0 : i32
    %c0_i32_0 = arith.constant 0 : i32
    %c0_i32_1 = arith.constant 0 : i32
    return %arg0, %c0_i32, %c0_i32_0 : i32, i32, i32
  }
  func.func @transform_1(%arg0: i32) -> (i32, i32) {
    %c0_i32 = arith.constant 0 : i32
    %c0_i32_0 = arith.constant 0 : i32
    %c0_i32_1 = arith.constant 0 : i32
    return %c0_i32, %c0_i32_0 : i32, i32
  }
  func.func @transform_2(%arg0: i32) -> (i32, i32) {
    %c0_i32 = arith.constant 0 : i32
    %c0_i32_0 = arith.constant 0 : i32
    %c0_i32_1 = arith.constant 0 : i32
    return %c0_i32, %c0_i32_0 : i32, i32
  }
  func.func @transform_3(%arg0: i32) -> (i32, i32) {
    %c0_i32 = arith.constant 0 : i32
    %c0_i32_0 = arith.constant 0 : i32
    %c0_i32_1 = arith.constant 0 : i32
    return %c0_i32, %c0_i32_0 : i32, i32
  }
  func.func @transform_4(%arg0: i32) -> (i32, i32, i32) {
    %c0_i32 = arith.constant 0 : i32
    %c0_i32_0 = arith.constant 0 : i32
    %c0_i32_1 = arith.constant 0 : i32
    return %arg0, %c0_i32, %c0_i32_0 : i32, i32, i32
  }
}

</mosaic_0001>

<llo_original>
// kernel: tpu_custom_call.1
$region0: #{tpu_custom_call.1}
  #allocation0 [shape = 'u32[]', space=smem, size = 0x4, offset = 0x4, fixed_abs, tag = 'smem constant byte address 0x4 - core index']
  #allocation1 [shape = 'u32[144,128]{1,0:T(1,128)}', space=vmem, size = 0x12000, scoped, tag = 'internal scratch']
  #allocation2 [shape = 'f32[64,512]{1,0:T(8,128)}', space=vmem, size = 0x20000, scoped, tag = 'scratch operand']
  %s0 = inlined_call_operand.hbm [shape: f32[8,64,128], index: 0, kind: input, shape index: {}]
  %s1 = inlined_call_operand.hbm [shape: f32[128,128], index: 1, kind: input, shape index: {}]
  %s2 = inlined_call_operand.vmem [shape: f32[1,128], index: 2, kind: input, shape index: {}]
  %s3 = inlined_call_operand.hbm [shape: f32[64,64], index: 3, kind: input, shape index: {}]
  %s4 = inlined_call_operand.hbm [shape: f32[8,64,128], index: 4, kind: output, shape index: {}]
  %s5 = sld [smem:[#allocation0]]
  $region61: #{tpu_custom_call.1} parent=0
    _
  %s7 = ssub.s32 1, %s5
  %s8 = scalar_select 0, %s7, %s5
  $region1: #{tpu_custom_call.1} parent=0
    #allocation3 [shape = 'u8[262144]{0}', space=vmem, size = 0x40000, scoped, tag = 'input window, operand 0']
    #allocation4 [shape = 's32[2]{0}', space=sflag, size = 0x8, scoped, tag = 'scoped memory for tpu_custom_call.1']
    #allocation5 [shape = 's32[2]{0}', space=sflag, size = 0x8, scoped, tag = 'scoped memory for tpu_custom_call.1']
    #allocation6 [shape = 'u8[65536]{0}', space=vmem, size = 0x10000, scoped, tag = 'input window, operand 1, single buffered']
    #allocation7 [shape = 's32[1]{0}', space=sflag, size = 0x4, scoped, tag = 'scoped memory for tpu_custom_call.1']
    #allocation8 [shape = 'u8[32768]{0}', space=vmem, size = 0x8000, scoped, tag = 'input window, operand 3, single buffered']
    #allocation9 [shape = 'u8[262144]{0}', space=vmem, size = 0x40000, scoped, tag = 'output window, operand 0']
    %9 = vsyncpa [#allocation4], 0
    %s10 = scalar_lea.sflag [#allocation4], 1
    %11 = vsyncpa %s10, 0
    %12 = vsyncpa [#allocation7], 0
    %13 = vsyncpa [#allocation5], 0
    %s14 = scalar_lea.sflag [#allocation5], 1
    %15 = vsyncpa %s14, 0
    loop: start=0, step=1, limit=4
    $region2: #{tpu_custom_call.1} parent=1 // loop_pre_header
      _
    $region3: #{tpu_custom_call.1} parent=1 // loop_header
      %s17 = sphi 0, %s21
      %p18 = scmp.ge.s32.totalorder %s17, 4
      %s27 = sphi 0, %s29
      %s30 = sphi 0, %s27
      %s31 = sphi 0, %s30
      %s47 = sphi 0, %s31
      %s51 = sphi 0, %s51
      %s53 = sphi 0, %s51
      %s54 = sphi 0, %s53
      %s68 = sphi 0, %s54
      %s72 = sphi 0, %s72
      %s74 = sphi 0, %s72
      %s75 = sphi 0, %s74
      %s89 = sphi 0, %s75
      %s93 = sphi 0, %s93
      %s95 = sphi 0, %s93
      %s96 = sphi 0, %s95
      %s110 = sphi 0, %s96
      %s116 = sphi 0, %s118
      %s119 = sphi 0, %s116
      %s120 = sphi 0, %s119
      %s136 = sphi 0, %s120
    $region4: #{tpu_custom_call.1} parent=1 // loop_header_branch
      %20 = sbr.rel (%p18) target = $region8
    $region5: #{tpu_custom_call.1} parent=1 // loop_body
      %s22 = ssub.s32 %s17, 1
      %s23 = ssub.s32 %s17, 2
      %s24 = sadd.s32 %s17, 1
      %s25 = ssub.s32 %s17, %s24
      %p26 = scmp.eq.s32.totalorder %s25, 0
      %s28 = sadd.s32 %s27, 1
      %s29 = scalar_select %p26, %s27, %s28
      %p32 = pneg %p26
      %p33 = scmp.eq.s32.totalorder %s17, 1
      %p34 = por %p32, %p33
      %p35 = scmp.ne.s32.totalorder %s27, %s30
      %p36 = scmp.eq.s32.totalorder %s17, 0
      %p37 = por %p35, %p36
      %p38 = scmp.ne.s32.totalorder %s27, %s30
      %p39 = scmp.eq.s32.totalorder %s22, 1
      %p40 = por %p38, %p39
      %p41 = scmp.ne.s32.totalorder %s30, %s31
      %p42 = scmp.eq.s32.totalorder %s22, 0
      %p43 = por %p41, %p42
      %p44 = scmp.ne.s32.totalorder %s30, %s31
      %p45 = scmp.eq.s32.totalorder %s23, 1
      %p46 = por %p44, %p45
      %p48 = scmp.ne.s32.totalorder %s31, %s47
      %p49 = scmp.eq.s32.totalorder %s23, 0
      %p50 = por %p48, %p49
      %s52 = sadd.s32 %s51, 1
      %p55 = scmp.eq.s32.totalorder %s17, 1
      %p56 = scmp.ne.s32.totalorder %s51, %s53
      %p57 = scmp.eq.s32.totalorder %s17, 0
      %p58 = por %p56, %p57
      %p59 = scmp.ne.s32.totalorder %s51, %s53
      %p60 = scmp.eq.s32.totalorder %s22, 1
      %p61 = por %p59, %p60
      %p62 = scmp.ne.s32.totalorder %s53, %s54
      %p63 = scmp.eq.s32.totalorder %s22, 0
      %p64 = por %p62, %p63
      %p65 = scmp.ne.s32.totalorder %s53, %s54
      %p66 = scmp.eq.s32.totalorder %s23, 1
      %p67 = por %p65, %p66
      %p69 = scmp.ne.s32.totalorder %s54, %s68
      %p70 = scmp.eq.s32.totalorder %s23, 0
      %p71 = por %p69, %p70
      %s73 = sadd.s32 %s72, 1
      %p76 = scmp.eq.s32.totalorder %s17, 1
      %p77 = scmp.ne.s32.totalorder %s72, %s74
      %p78 = scmp.eq.s32.totalorder %s17, 0
      %p79 = por %p77, %p78
      %p80 = scmp.ne.s32.totalorder %s72, %s74
      %p81 = scmp.eq.s32.totalorder %s22, 1
      %p82 = por %p80, %p81
      %p83 = scmp.ne.s32.totalorder %s74, %s75
      %p84 = scmp.eq.s32.totalorder %s22, 0
      %p85 = por %p83, %p84
      %p86 = scmp.ne.s32.totalorder %s74, %s75
      %p87 = scmp.eq.s32.totalorder %s23, 1
      %p88 = por %p86, %p87
      %p90 = scmp.ne.s32.totalorder %s75, %s89
      %p91 = scmp.eq.s32.totalorder %s23, 0
      %p92 = por %p90, %p91
      %s94 = sadd.s32 %s93, 1
      %p97 = scmp.eq.s32.totalorder %s17, 1
      %p98 = scmp.ne.s32.totalorder %s93, %s95
      %p99 = scmp.eq.s32.totalorder %s17, 0
      %p100 = por %p98, %p99
      %p101 = scmp.ne.s32.totalorder %s93, %s95
      %p102 = scmp.eq.s32.totalorder %s22, 1
      %p103 = por %p101, %p102
      %p104 = scmp.ne.s32.totalorder %s95, %s96
      %p105 = scmp.eq.s32.totalorder %s22, 0
      %p106 = por %p104, %p105
      %p107 = scmp.ne.s32.totalorder %s95, %s96
      %p108 = scmp.eq.s32.totalorder %s23, 1
      %p109 = por %p107, %p108
      %p111 = scmp.ne.s32.totalorder %s96, %s110
      %p112 = scmp.eq.s32.totalorder %s23, 0
      %p113 = por %p111, %p112
      %s114 = ssub.s32 %s17, %s24
      %p115 = scmp.eq.s32.totalorder %s114, 0
      %s117 = sadd.s32 %s116, 1
      %s118 = scalar_select %p115, %s116, %s117
      %p121 = pneg %p115
      %p122 = scmp.eq.s32.totalorder %s17, 1
      %p123 = por %p121, %p122
      %p124 = scmp.ne.s32.totalorder %s116, %s119
      %p125 = scmp.eq.s32.totalorder %s17, 0
      %p126 = por %p124, %p125
      %p127 = scmp.ne.s32.totalorder %s116, %s119
      %p128 = scmp.eq.s32.totalorder %s22, 1
      %p129 = por %p127, %p128
      %p130 = scmp.ne.s32.totalorder %s119, %s120
      %p131 = scmp.eq.s32.totalorder %s22, 0
      %p132 = por %p130, %p131
      %p133 = scmp.ne.s32.totalorder %s119, %s120
      %p134 = scmp.eq.s32.totalorder %s23, 1
      %p135 = por %p133, %p134
      %p137 = scmp.ne.s32.totalorder %s120, %s136
      %p138 = scmp.eq.s32.totalorder %s23, 0
      %p139 = por %p137, %p138
      %p140 = scmp.le.s32.totalorder 1, %s17
      %p141 = scmp.lt.s32.totalorder %s17, 3
      %p142 = pnand %p140, %p141
      %p143 = pneg %p142
      // Predicated region
      $region9: #{tpu_custom_call.1} parent=5 // pred_check
        _
      $region10: #{tpu_custom_call.1} parent=5 // pred_check_branch
        %145 = sbr.rel (%p142) target = $region12
      $region11: #{tpu_custom_call.1} parent=5 // pred_region
        %s146 = ssub.s32 %s17, 1
        // Predicated region
        $region13: #{tpu_custom_call.1} parent=11 // pred_check
          %p147 = pneg %p64
        $region14: #{tpu_custom_call.1} parent=11 // pred_check_branch
          %149 = sbr.rel (%p147) target = $region16
        $region15: #{tpu_custom_call.1} parent=11 // pred_region
          %s151 = ssub.s32 2048, 2048
          %152 = vsyncadd [#allocation7], %s151
          %s153 = sshll.u32 [#allocation6], 4
          %s154 = int_to_ptr.vmem [resolvable:$true] %s153
          %159 = dma.hbm_to_vmem [thread:$0]  %s1, 2048, %s154, [#allocation7], 128, 128, 8
        $region16: #{tpu_custom_call.1} parent=11 // pred_fallthru
          _
        // Predicated region
        $region17: #{tpu_custom_call.1} parent=11 // pred_check
          %p160 = pneg %p85
        $region18: #{tpu_custom_call.1} parent=11 // pred_check_branch
          %162 = sbr.rel (%p160) target = $region20
        $region19: #{tpu_custom_call.1} parent=11 // pred_region
          _
        $region20: #{tpu_custom_call.1} parent=11 // pred_fallthru
          _
        // Predicated region
        $region21: #{tpu_custom_call.1} parent=11 // pred_check
          %p163 = pneg %p106
        $region22: #{tpu_custom_call.1} parent=11 // pred_check_branch
          %165 = sbr.rel (%p163) target = $region24
        $region23: #{tpu_custom_call.1} parent=11 // pred_region
          %s167 = ssub.s32 1024, 1024
          %168 = vsyncadd [#allocation7], %s167
          %s169 = sshll.u32 [#allocation8], 4
          %s170 = int_to_ptr.vmem [resolvable:$true] %s169
          %175 = dma.hbm_to_vmem [thread:$0]  %s3, 1024, %s170, [#allocation7], 128, 128, 8
        $region24: #{tpu_custom_call.1} parent=11 // pred_fallthru
          _
      $region12: #{tpu_custom_call.1} parent=5 // pred_fallthru
        _
      %p176 = scmp.lt.s32.totalorder %s17, 2
      // Predicated region
      $region25: #{tpu_custom_call.1} parent=5 // pred_check
        %p177 = pneg %p176
      $region26: #{tpu_custom_call.1} parent=5 // pred_check_branch
        %179 = sbr.rel (%p177) target = $region28
      $region27: #{tpu_custom_call.1} parent=5 // pred_region
        // Predicated region
        $region29: #{tpu_custom_call.1} parent=27 // pred_check
          %p180 = pneg %p37
        $region30: #{tpu_custom_call.1} parent=27 // pred_check_branch
          %182 = sbr.rel (%p180) target = $region32
        $region31: #{tpu_custom_call.1} parent=27 // pred_region
          %s183 = sand.u32 %s27, 1
          %s184 = scalar_lea.sflag [#allocation4], %s183
          %s185 = sand.u32 %s27, 1
          %s186 = smul.addr %s185, 256
          %s187 = scalar_lea.vmem [#allocation3], %s186
          %s188 = smul.u32 4, %s17
          %s190 = ssub.s32 4096, 4096
          %191 = vsyncadd %s184, %s190
          %s192 = smul.addr %s188, 8
          %s193 = smul.addr %s192, 128
          %s194 = scalar_lea.hbm %s0, %s193
          %s195 = sshll.u32 %s187, 4
          %s196 = int_to_ptr.vmem [resolvable:$true] %s195
          %201 = dma.hbm_to_vmem [thread:$0]  %s194, 4096, %s196, %s184, 128, 128, 8
        $region32: #{tpu_custom_call.1} parent=27 // pred_fallthru
          _
      $region28: #{tpu_custom_call.1} parent=5 // pred_fallthru
        _
      %p202 = scmp.le.s32.totalorder 1, %s17
      %p203 = scmp.lt.s32.totalorder %s17, 3
      %p204 = pnand %p202, %p203
      %p205 = pneg %p204
      // Predicated region
      $region33: #{tpu_custom_call.1} parent=5 // pred_check
        _
      $region34: #{tpu_custom_call.1} parent=5 // pred_check_branch
        %207 = sbr.rel (%p204) target = $region36
      $region35: #{tpu_custom_call.1} parent=5 // pred_region
        %s208 = ssub.s32 %s17, 1
        %s209 = sand.u32 %s30, 1
        %s210 = scalar_lea.sflag [#allocation4], %s209
        %s211 = sand.u32 %s30, 1
        %s212 = smul.addr %s211, 256
        %s213 = scalar_lea.vmem [#allocation3], %s212
        // Predicated region
        $region37: #{tpu_custom_call.1} parent=35 // pred_check
          %p214 = pneg %p43
        $region38: #{tpu_custom_call.1} parent=35 // pred_check_branch
          %216 = sbr.rel (%p214) target = $region40
        $region39: #{tpu_custom_call.1} parent=35 // pred_region
          %217 = dma.done %s210, 4096
        $region40: #{tpu_custom_call.1} parent=35 // pred_fallthru
          _
        // Predicated region
        $region41: #{tpu_custom_call.1} parent=35 // pred_check
          %p218 = pneg %p64
        $region42: #{tpu_custom_call.1} parent=35 // pred_check_branch
          %220 = sbr.rel (%p218) target = $region44
        $region43: #{tpu_custom_call.1} parent=35 // pred_region
          %221 = dma.done [#allocation7], 2048
        $region44: #{tpu_custom_call.1} parent=35 // pred_fallthru
          _
        // Predicated region
        $region45: #{tpu_custom_call.1} parent=35 // pred_check
          %p222 = pneg %p106
        $region46: #{tpu_custom_call.1} parent=35 // pred_check_branch
          %224 = sbr.rel (%p222) target = $region48
        $region47: #{tpu_custom_call.1} parent=35 // pred_region
          %225 = dma.done [#allocation7], 1024
        $region48: #{tpu_custom_call.1} parent=35 // pred_fallthru
          _
        %s226 = sand.u32 %s30, 1
        %s227 = scalar_lea.sflag [#allocation4], %s226
        %s228 = sand.u32 %s30, 1
        %s229 = smul.addr %s228, 256
        %s230 = scalar_lea.vmem [#allocation3], %s229
        %p231 = pneg %p43
        %p232 = pneg %p40
        %p233 = pneg %p64
        %p234 = pneg %p61
        %p235 = pneg %p85
        %p236 = pneg %p82
        %p237 = pneg %p106
        %p238 = pneg %p103
        %p239 = pneg %p132
        %p240 = pneg %p129
        %s241 = sand.u32 %s119, 1
        %s242 = scalar_lea.sflag [#allocation5], %s241
        %s243 = sand.u32 %s119, 1
        %s244 = smul.addr %s243, 256
        %s245 = scalar_lea.vmem [#allocation9], %s244
        %s246 = smul.u32 4, %s22
        %s247 = smul.u32 4, %s22
        %v248 = vld [vmem:[%s213] sm:$0xff]
        %v249 = vld [vmem:[%s213 + $0x8] sm:$0xff]
        %v250 = vld [vmem:[%s213 + $0x10] sm:$0xff]
        %v251 = vld [vmem:[%s213 + $0x18] sm:$0xff]
        %v252 = vld [vmem:[%s213 + $0x20] sm:$0xff]
        %v253 = vld [vmem:[%s213 + $0x28] sm:$0xff]
        %v254 = vld [vmem:[%s213 + $0x30] sm:$0xff]
        %v255 = vld [vmem:[%s213 + $0x38] sm:$0xff]
        %v256 = vld [vmem:[%s213 + $0x40] sm:$0xff]
        %v257 = vld [vmem:[%s213 + $0x48] sm:$0xff]
        %v258 = vld [vmem:[%s213 + $0x50] sm:$0xff]
        %v259 = vld [vmem:[%s213 + $0x58] sm:$0xff]
        %v260 = vld [vmem:[%s213 + $0x60] sm:$0xff]
        %v261 = vld [vmem:[%s213 + $0x68] sm:$0xff]
        %v262 = vld [vmem:[%s213 + $0x70] sm:$0xff]
        %v263 = vld [vmem:[%s213 + $0x78] sm:$0xff]
        %v264 = vld [vmem:[%s213 + $0x80] sm:$0xff]
        %v265 = vld [vmem:[%s213 + $0x88] sm:$0xff]
        %v266 = vld [vmem:[%s213 + $0x90] sm:$0xff]
        %v267 = vld [vmem:[%s213 + $0x98] sm:$0xff]
        %v268 = vld [vmem:[%s213 + $0xa0] sm:$0xff]
        %v269 = vld [vmem:[%s213 + $0xa8] sm:$0xff]
        %v270 = vld [vmem:[%s213 + $0xb0] sm:$0xff]
        %v271 = vld [vmem:[%s213 + $0xb8] sm:$0xff]
        %v272 = vld [vmem:[%s213 + $0xc0] sm:$0xff]
        %v273 = vld [vmem:[%s213 + $0xc8] sm:$0xff]
        %v274 = vld [vmem:[%s213 + $0xd0] sm:$0xff]
        %v275 = vld [vmem:[%s213 + $0xd8] sm:$0xff]
        %v276 = vld [vmem:[%s213 + $0xe0] sm:$0xff]
        %v277 = vld [vmem:[%s213 + $0xe8] sm:$0xff]
        %v278 = vld [vmem:[%s213 + $0xf0] sm:$0xff]
        %v279 = vld [vmem:[%s213 + $0xf8] sm:$0xff]
        %v280 = vld [vmem:[#allocation6] sm:$0xff]
        %v281 = vld [vmem:[#allocation6 + $0x8] sm:$0xff]
        %v282 = vld [vmem:[#allocation6 + $0x10] sm:$0xff]
        %v283 = vld [vmem:[#allocation6 + $0x18] sm:$0xff]
        %v284 = vld [vmem:[#allocation6 + $0x20] sm:$0xff]
        %v285 = vld [vmem:[#allocation6 + $0x28] sm:$0xff]
        %v286 = vld [vmem:[#allocation6 + $0x30] sm:$0xff]
        %v287 = vld [vmem:[#allocation6 + $0x38] sm:$0xff]
        %v288 = vld [vmem:[#allocation6 + $0x40] sm:$0xff]
        %v289 = vld [vmem:[#allocation6 + $0x48] sm:$0xff]
        %v290 = vld [vmem:[#allocation6 + $0x50] sm:$0xff]
        %v291 = vld [vmem:[#allocation6 + $0x58] sm:$0xff]
        %v292 = vld [vmem:[#allocation6 + $0x60] sm:$0xff]
        %v293 = vld [vmem:[#allocation6 + $0x68] sm:$0xff]
        %v294 = vld [vmem:[#allocation6 + $0x70] sm:$0xff]
        %v295 = vld [vmem:[#allocation6 + $0x78] sm:$0xff]
        %v296 = vld [vmem:[%s2] sm:$0x1]
        %v298 = vlaneseq
        %v299 = vshrl.u32 %v298, 7
        %v300 = vsub.s32 0, %v299
        %v301 = vrot.slane %v296, %v300
        %303 = vmatprep.subr.mxu0 0.0
        %304 = vmatpush1.msra.mxu0 %v280
        %305 = vmatprep.subr.mxu0 0.0
        %306 = vmatpush1.msra.mxu0 %v281
        %307 = vmatprep.subr.mxu0 0.0
        %308 = vmatpush1.msra.mxu0 %v282
        %309 = vmatprep.subr.mxu0 0.0
        %310 = vmatpush1.msra.mxu0 %v283
        %311 = vmatprep.subr.mxu0 0.0
        %312 = vmatpush1.msra.mxu0 %v284
        %313 = vmatprep.subr.mxu0 0.0
        %314 = vmatpush1.msra.mxu0 %v285
        %315 = vmatprep.subr.mxu0 0.0
        %316 = vmatpush1.msra.mxu0 %v286
        %317 = vmatprep.subr.mxu0 0.0
        %318 = vmatpush1.msra.mxu0 %v287
        %319 = vmatprep.subr.mxu0 0.0
        %320 = vmatpush1.msra.mxu0 %v288
        %321 = vmatprep.subr.mxu0 0.0
        %322 = vmatpush1.msra.mxu0 %v289
        %323 = vmatprep.subr.mxu0 0.0
        %324 = vmatpush1.msra.mxu0 %v290
        %325 = vmatprep.subr.mxu0 0.0
        %326 = vmatpush1.msra.mxu0 %v291
        %327 = vmatprep.subr.mxu0 0.0
        %328 = vmatpush1.msra.mxu0 %v292
        %329 = vmatprep.subr.mxu0 0.0
        %330 = vmatpush1.msra.mxu0 %v293
        %331 = vmatprep.subr.mxu0 0.0
        %332 = vmatpush1.msra.mxu0 %v294
        %333 = vmatprep.subr.mxu0 0.0
        %334 = vmatpush1.msra.mxu0 %v295
        %335 = vmatprep.subr.mxu0 0.0
        %336 = vmatpush1.msra.mxu0 0.0
        %337 = vmatprep.subr.mxu0 0.0
        %338 = vmatpush1.msra.mxu0 0.0
        %339 = vmatprep.subr.mxu0 0.0
        %340 = vmatpush1.msra.mxu0 0.0
        %341 = vmatprep.subr.mxu0 0.0
        %342 = vmatpush1.msra.mxu0 0.0
        %343 = vmatprep.subr.mxu0 0.0
        %344 = vmatpush1.msra.mxu0 0.0
        %345 = vmatprep.subr.mxu0 0.0
        %346 = vmatpush1.msra.mxu0 0.0
        %347 = vmatprep.subr.mxu0 0.0
        %348 = vmatpush1.msra.mxu0 0.0
        %349 = vmatprep.subr.mxu0 0.0
        %350 = vmatpush1.msra.mxu0 0.0
        %351 = vmatprep.subr.mxu0 0.0
        %352 = vmatpush1.msra.mxu0 0.0
        %353 = vmatprep.subr.mxu0 0.0
        %354 = vmatpush1.msra.mxu0 0.0
        %355 = vmatprep.subr.mxu0 0.0
        %356 = vmatpush1.msra.mxu0 0.0
        %357 = vmatprep.subr.mxu0 0.0
        %358 = vmatpush1.msra.mxu0 0.0
        %359 = vmatprep.subr.mxu0 0.0
        %360 = vmatpush1.msra.mxu0 0.0
        %361 = vmatprep.subr.mxu0 0.0
        %362 = vmatpush1.msra.mxu0 0.0
        %363 = vmatprep.subr.mxu0 0.0
        %364 = vmatpush1.msra.mxu0 0.0
        %365 = vmatprep.subr.mxu0 0.0
        %366 = vmatpush1.msra.mxu0 0.0
        %367 = vmatprep.mubr.f32.mxu0 0.0
        %368 = vmatmul.mubr.f32.gmra.mrb[0].mxu0 %v248
        %v369 = vpop.f32.mrb[0].mxu0
        %v370 = vadd.f32 %v301, %v369
        %v371 = vpop.f32.mrb[0].mxu0
        %372 = vmatprep.mubr.f32.mxu0 0.0
        %373 = vmatmul.mubr.f32.gmra.mrb[0].mxu0 %v249
        %v374 = vpop.f32.mrb[0].mxu0
        %v375 = vadd.f32 %v301, %v374
        %v376 = vpop.f32.mrb[0].mxu0
        %377 = vmatprep.mubr.f32.mxu0 0.0
        %378 = vmatmul.mubr.f32.gmra.mrb[0].mxu0 %v250
        %v379 = vpop.f32.mrb[0].mxu0
        %v380 = vadd.f32 %v301, %v379
        %v381 = vpop.f32.mrb[0].mxu0
        %382 = vmatprep.mubr.f32.mxu0 0.0
        %383 = vmatmul.mubr.f32.gmra.mrb[0].mxu0 %v251
        %v384 = vpop.f32.mrb[0].mxu0
        %v385 = vadd.f32 %v301, %v384
        %v386 = vpop.f32.mrb[0].mxu0
        %387 = vmatprep.mubr.f32.mxu0 0.0
        %388 = vmatmul.mubr.f32.gmra.mrb[0].mxu0 %v252
        %v389 = vpop.f32.mrb[0].mxu0
        %v390 = vadd.f32 %v301, %v389
        %v391 = vpop.f32.mrb[0].mxu0
        %392 = vmatprep.mubr.f32.mxu0 0.0
        %393 = vmatmul.mubr.f32.gmra.mrb[0].mxu0 %v253
        %v394 = vpop.f32.mrb[0].mxu0
        %v395 = vadd.f32 %v301, %v394
        %v396 = vpop.f32.mrb[0].mxu0
        %397 = vmatprep.mubr.f32.mxu0 0.0
        %398 = vmatmul.mubr.f32.gmra.mrb[0].mxu0 %v254
        %v399 = vpop.f32.mrb[0].mxu0
        %v400 = vadd.f32 %v301, %v399
        %v401 = vpop.f32.mrb[0].mxu0
        %402 = vmatprep.mubr.f32.mxu0 0.0
        %403 = vmatmul.mubr.f32.gmra.mrb[0].mxu0 %v255
        %v404 = vpop.f32.mrb[0].mxu0
        %v405 = vadd.f32 %v301, %v404
        %v406 = vpop.f32.mrb[0].mxu0
        %407 = vmatprep.mubr.f32.mxu0 0.0
        %408 = vmatmul.mubr.f32.gmra.mrb[0].mxu0 %v256
        %v409 = vpop.f32.mrb[0].mxu0
        %v410 = vadd.f32 %v301, %v409
        %v411 = vpop.f32.mrb[0].mxu0
        %412 = vmatprep.mubr.f32.mxu0 0.0
        %413 = vmatmul.mubr.f32.gmra.mrb[0].mxu0 %v257
        %v414 = vpop.f32.mrb[0].mxu0
        %v415 = vadd.f32 %v301, %v414
        %v416 = vpop.f32.mrb[0].mxu0
        %417 = vmatprep.mubr.f32.mxu0 0.0
        %418 = vmatmul.mubr.f32.gmra.mrb[0].mxu0 %v258
        %v419 = vpop.f32.mrb[0].mxu0
        %v420 = vadd.f32 %v301, %v419
        %v421 = vpop.f32.mrb[0].mxu0
        %422 = vmatprep.mubr.f32.mxu0 0.0
        %423 = vmatmul.mubr.f32.gmra.mrb[0].mxu0 %v259
        %v424 = vpop.f32.mrb[0].mxu0
        %v425 = vadd.f32 %v301, %v424
        %v426 = vpop.f32.mrb[0].mxu0
        %427 = vmatprep.mubr.f32.mxu0 0.0
        %428 = vmatmul.mubr.f32.gmra.mrb[0].mxu0 %v260
        %v429 = vpop.f32.mrb[0].mxu0
        %v430 = vadd.f32 %v301, %v429
        %v431 = vpop.f32.mrb[0].mxu0
        %432 = vmatprep.mubr.f32.mxu0 0.0
        %433 = vmatmul.mubr.f32.gmra.mrb[0].mxu0 %v261
        %v434 = vpop.f32.mrb[0].mxu0
        %v435 = vadd.f32 %v301, %v434
        %v436 = vpop.f32.mrb[0].mxu0
        %437 = vmatprep.mubr.f32.mxu0 0.0
        %438 = vmatmul.mubr.f32.gmra.mrb[0].mxu0 %v262
        %v439 = vpop.f32.mrb[0].mxu0
        %v440 = vadd.f32 %v301, %v439
        %v441 = vpop.f32.mrb[0].mxu0
        %442 = vmatprep.mubr.f32.mxu0 0.0
        %443 = vmatmul.mubr.f32.gmra.mrb[0].mxu0 %v263
        %v444 = vpop.f32.mrb[0].mxu0
        %v445 = vadd.f32 %v301, %v444
        %v446 = vpop.f32.mrb[0].mxu0
        %447 = vmatprep.mubr.f32.mxu0 0.0
        %448 = vmatmul.mubr.f32.gmra.mrb[0].mxu0 %v264
        %v449 = vpop.f32.mrb[0].mxu0
        %v450 = vadd.f32 %v301, %v449
        %v451 = vpop.f32.mrb[0].mxu0
        %452 = vmatprep.mubr.f32.mxu0 0.0
        %453 = vmatmul.mubr.f32.gmra.mrb[0].mxu0 %v265
        %v454 = vpop.f32.mrb[0].mxu0
        %v455 = vadd.f32 %v301, %v454
        %v456 = vpop.f32.mrb[0].mxu0
        %457 = vmatprep.mubr.f32.mxu0 0.0
        %458 = vmatmul.mubr.f32.gmra.mrb[0].mxu0 %v266
        %v459 = vpop.f32.mrb[0].mxu0
        %v460 = vadd.f32 %v301, %v459
        %v461 = vpop.f32.mrb[0].mxu0
        %462 = vmatprep.mubr.f32.mxu0 0.0
        %463 = vmatmul.mubr.f32.gmra.mrb[0].mxu0 %v267
        %v464 = vpop.f32.mrb[0].mxu0
        %v465 = vadd.f32 %v301, %v464
        %v466 = vpop.f32.mrb[0].mxu0
        %467 = vmatprep.mubr.f32.mxu0 0.0
        %468 = vmatmul.mubr.f32.gmra.mrb[0].mxu0 %v268
        %v469 = vpop.f32.mrb[0].mxu0
        %v470 = vadd.f32 %v301, %v469
        %v471 = vpop.f32.mrb[0].mxu0
        %472 = vmatprep.mubr.f32.mxu0 0.0
        %473 = vmatmul.mubr.f32.gmra.mrb[0].mxu0 %v269
        %v474 = vpop.f32.mrb[0].mxu0
        %v475 = vadd.f32 %v301, %v474
        %v476 = vpop.f32.mrb[0].mxu0
        %477 = vmatprep.mubr.f32.mxu0 0.0
        %478 = vmatmul.mubr.f32.gmra.mrb[0].mxu0 %v270
        %v479 = vpop.f32.mrb[0].mxu0
        %v480 = vadd.f32 %v301, %v479
        %v481 = vpop.f32.mrb[0].mxu0
        %482 = vmatprep.mubr.f32.mxu0 0.0
        %483 = vmatmul.mubr.f32.gmra.mrb[0].mxu0 %v271
        %v484 = vpop.f32.mrb[0].mxu0
        %v485 = vadd.f32 %v301, %v484
        %v486 = vpop.f32.mrb[0].mxu0
        %487 = vmatprep.mubr.f32.mxu0 0.0
        %488 = vmatmul.mubr.f32.gmra.mrb[0].mxu0 %v272
        %v489 = vpop.f32.mrb[0].mxu0
        %v490 = vadd.f32 %v301, %v489
        %v491 = vpop.f32.mrb[0].mxu0
        %492 = vmatprep.mubr.f32.mxu0 0.0
        %493 = vmatmul.mubr.f32.gmra.mrb[0].mxu0 %v273
        %v494 = vpop.f32.mrb[0].mxu0
        %v495 = vadd.f32 %v301, %v494
        %v496 = vpop.f32.mrb[0].mxu0
        %497 = vmatprep.mubr.f32.mxu0 0.0
        %498 = vmatmul.mubr.f32.gmra.mrb[0].mxu0 %v274
        %v499 = vpop.f32.mrb[0].mxu0
        %v500 = vadd.f32 %v301, %v499
        %v501 = vpop.f32.mrb[0].mxu0
        %502 = vmatprep.mubr.f32.mxu0 0.0
        %503 = vmatmul.mubr.f32.gmra.mrb[0].mxu0 %v275
        %v504 = vpop.f32.mrb[0].mxu0
        %v505 = vadd.f32 %v301, %v504
        %v506 = vpop.f32.mrb[0].mxu0
        %507 = vmatprep.mubr.f32.mxu0 0.0
        %508 = vmatmul.mubr.f32.gmra.mrb[0].mxu0 %v276
        %v509 = vpop.f32.mrb[0].mxu0
        %v510 = vadd.f32 %v301, %v509
        %v511 = vpop.f32.mrb[0].mxu0
        %512 = vmatprep.mubr.f32.mxu0 0.0
        %513 = vmatmul.mubr.f32.gmra.mrb[0].mxu0 %v277
        %v514 = vpop.f32.mrb[0].mxu0
        %v515 = vadd.f32 %v301, %v514
        %v516 = vpop.f32.mrb[0].mxu0
        %517 = vmatprep.mubr.f32.mxu0 0.0
        %518 = vmatmul.mubr.f32.gmra.mrb[0].mxu0 %v278
        %v519 = vpop.f32.mrb[0].mxu0
        %v520 = vadd.f32 %v301, %v519
        %v521 = vpop.f32.mrb[0].mxu0
        %522 = vmatprep.mubr.f32.mxu0 0.0
        %523 = vmatmul.mubr.f32.gmra.mrb[0].mxu0 %v279
        %v524 = vpop.f32.mrb[0].mxu0
        %v525 = vadd.f32 %v301, %v524
        %v526 = vpop.f32.mrb[0].mxu0
        %527 = vdwg.mxu0
        %528 = vst [vmem:[#allocation2] sm:$0xff] %v370
        %529 = vst [vmem:[#allocation2 + $0x20] sm:$0xff] %v375
        %530 = vst [vmem:[#allocation2 + $0x40] sm:$0xff] %v380
        %531 = vst [vmem:[#allocation2 + $0x60] sm:$0xff] %v385
        %532 = vst [vmem:[#allocation2 + $0x80] sm:$0xff] %v390
        %533 = vst [vmem:[#allocation2 + $0xa0] sm:$0xff] %v395
        %534 = vst [vmem:[#allocation2 + $0xc0] sm:$0xff] %v400
        %535 = vst [vmem:[#allocation2 + $0xe0] sm:$0xff] %v405
        %536 = vst [vmem:[#allocation2 + $0x8] sm:$0xff] %v410
        %537 = vst [vmem:[#allocation2 + $0x28] sm:$0xff] %v415
        %538 = vst [vmem:[#allocation2 + $0x48] sm:$0xff] %v420
        %539 = vst [vmem:[#allocation2 + $0x68] sm:$0xff] %v425
        %540 = vst [vmem:[#allocation2 + $0x88] sm:$0xff] %v430
        %541 = vst [vmem:[#allocation2 + $0xa8] sm:$0xff] %v435
        %542 = vst [vmem:[#allocation2 + $0xc8] sm:$0xff] %v440
        %543 = vst [vmem:[#allocation2 + $0xe8] sm:$0xff] %v445
        %544 = vst [vmem:[#allocation2 + $0x10] sm:$0xff] %v450
        %545 = vst [vmem:[#allocation2 + $0x30] sm:$0xff] %v455
        %546 = vst [vmem:[#allocation2 + $0x50] sm:$0xff] %v460
        %547 = vst [vmem:[#allocation2 + $0x70] sm:$0xff] %v465
        %548 = vst [vmem:[#allocation2 + $0x90] sm:$0xff] %v470
        %549 = vst [vmem:[#allocation2 + $0xb0] sm:$0xff] %v475
        %550 = vst [vmem:[#allocation2 + $0xd0] sm:$0xff] %v480
        %551 = vst [vmem:[#allocation2 + $0xf0] sm:$0xff] %v485
        %552 = vst [vmem:[#allocation2 + $0x18] sm:$0xff] %v490
        %553 = vst [vmem:[#allocation2 + $0x38] sm:$0xff] %v495
        %554 = vst [vmem:[#allocation2 + $0x58] sm:$0xff] %v500
        %555 = vst [vmem:[#allocation2 + $0x78] sm:$0xff] %v505
        %556 = vst [vmem:[#allocation2 + $0x98] sm:$0xff] %v510
        %557 = vst [vmem:[#allocation2 + $0xb8] sm:$0xff] %v515
        %558 = vst [vmem:[#allocation2 + $0xd8] sm:$0xff] %v520
        %559 = vst [vmem:[#allocation2 + $0xf8] sm:$0xff] %v525
        %v560 = vld [vmem:[#allocation8] sm:$0xff]
        %v561 = vld [vmem:[#allocation8 + $0x8] sm:$0xff]
        %v562 = vld [vmem:[#allocation8 + $0x10] sm:$0xff]
        %v563 = vld [vmem:[#allocation8 + $0x18] sm:$0xff]
        %v564 = vld [vmem:[#allocation8 + $0x20] sm:$0xff]
        %v565 = vld [vmem:[#allocation8 + $0x28] sm:$0xff]
        %v566 = vld [vmem:[#allocation8 + $0x30] sm:$0xff]
        %v567 = vld [vmem:[#allocation8 + $0x38] sm:$0xff]
        %v568 = vld [vmem:[#allocation2] sm:$0xff]
        %v569 = vld [vmem:[#allocation2 + $0x8] sm:$0xff]
        %v570 = vld [vmem:[#allocation2 + $0x10] sm:$0xff]
        %v571 = vld [vmem:[#allocation2 + $0x18] sm:$0xff]
        %v572 = vld [vmem:[#allocation2 + $0x20] sm:$0xff]
        %v573 = vld [vmem:[#allocation2 + $0x28] sm:$0xff]
        %v574 = vld [vmem:[#allocation2 + $0x30] sm:$0xff]
        %v575 = vld [vmem:[#allocation2 + $0x38] sm:$0xff]
        %v576 = vld [vmem:[#allocation2 + $0x40] sm:$0xff]
        %v577 = vld [vmem:[#allocation2 + $0x48] sm:$0xff]
        %v578 = vld [vmem:[#allocation2 + $0x50] sm:$0xff]
        %v579 = vld [vmem:[#allocation2 + $0x58] sm:$0xff]
        %v580 = vld [vmem:[#allocation2 + $0x60] sm:$0xff]
        %v581 = vld [vmem:[#allocation2 + $0x68] sm:$0xff]
        %v582 = vld [vmem:[#allocation2 + $0x70] sm:$0xff]
        %v583 = vld [vmem:[#allocation2 + $0x78] sm:$0xff]
        %v584 = vld [vmem:[#allocation2 + $0x80] sm:$0xff]
        %v585 = vld [vmem:[#allocation2 + $0x88] sm:$0xff]
        %v586 = vld [vmem:[#allocation2 + $0x90] sm:$0xff]
        %v587 = vld [vmem:[#allocation2 + $0x98] sm:$0xff]
        %v588 = vld [vmem:[#allocation2 + $0xa0] sm:$0xff]
        %v589 = vld [vmem:[#allocation2 + $0xa8] sm:$0xff]
        %v590 = vld [vmem:[#allocation2 + $0xb0] sm:$0xff]
        %v591 = vld [vmem:[#allocation2 + $0xb8] sm:$0xff]
        %v592 = vld [vmem:[#allocation2 + $0xc0] sm:$0xff]
        %v593 = vld [vmem:[#allocation2 + $0xc8] sm:$0xff]
        %v594 = vld [vmem:[#allocation2 + $0xd0] sm:$0xff]
        %v595 = vld [vmem:[#allocation2 + $0xd8] sm:$0xff]
        %v596 = vld [vmem:[#allocation2 + $0xe0] sm:$0xff]
        %v597 = vld [vmem:[#allocation2 + $0xe8] sm:$0xff]
        %v598 = vld [vmem:[#allocation2 + $0xf0] sm:$0xff]
        %v599 = vld [vmem:[#allocation2 + $0xf8] sm:$0xff]
        %vm600 = vcmask 523264
        %v602 = vsel %vm600, %v560, 0
        %v605 = vsel %vm600, %v561, 0
        %v608 = vsel %vm600, %v562, 0
        %v611 = vsel %vm600, %v563, 0
        %v614 = vsel %vm600, %v564, 0
        %v617 = vsel %vm600, %v565, 0
        %v620 = vsel %vm600, %v566, 0
        %v623 = vsel %vm600, %v567, 0
        %625 = vmatprep.subr.mxu0 %v569
        %626 = vmatpush1.msra.mxu0 %v568
        %627 = vmatprep.subr.mxu0 %v573
        %628 = vmatpush1.msra.mxu0 %v572
        %629 = vmatprep.subr.mxu0 %v577
        %630 = vmatpush1.msra.mxu0 %v576
        %631 = vmatprep.subr.mxu0 %v581
        %632 = vmatpush1.msra.mxu0 %v580
        %633 = vmatprep.subr.mxu0 %v585
        %634 = vmatpush1.msra.mxu0 %v584
        %635 = vmatprep.subr.mxu0 %v589
        %636 = vmatpush1.msra.mxu0 %v588
        %637 = vmatprep.subr.mxu0 %v593
        %638 = vmatpush1.msra.mxu0 %v592
        %639 = vmatprep.subr.mxu0 %v597
        %640 = vmatpush1.msra.mxu0 %v596
        %641 = vmatprep.subr.mxu0 0.0
        %642 = vmatpush1.msra.mxu0 0.0
        %643 = vmatprep.subr.mxu0 0.0
        %644 = vmatpush1.msra.mxu0 0.0
        %645 = vmatprep.subr.mxu0 0.0
        %646 = vmatpush1.msra.mxu0 0.0
        %647 = vmatprep.subr.mxu0 0.0
        %648 = vmatpush1.msra.mxu0 0.0
        %649 = vmatprep.subr.mxu0 0.0
        %650 = vmatpush1.msra.mxu0 0.0
        %651 = vmatprep.subr.mxu0 0.0
        %652 = vmatpush1.msra.mxu0 0.0
        %653 = vmatprep.subr.mxu0 0.0
        %654 = vmatpush1.msra.mxu0 0.0
        %655 = vmatprep.subr.mxu0 0.0
        %656 = vmatpush1.msra.mxu0 0.0
        %657 = vmatprep.subr.mxu0 0.0
        %658 = vmatpush1.msra.mxu0 0.0
        %659 = vmatprep.subr.mxu0 0.0
        %660 = vmatpush1.msra.mxu0 0.0
        %661 = vmatprep.subr.mxu0 0.0
        %662 = vmatpush1.msra.mxu0 0.0
        %663 = vmatprep.subr.mxu0 0.0
        %664 = vmatpush1.msra.mxu0 0.0
        %665 = vmatprep.subr.mxu0 0.0
        %666 = vmatpush1.msra.mxu0 0.0
        %667 = vmatprep.subr.mxu0 0.0
        %668 = vmatpush1.msra.mxu0 0.0
        %669 = vmatprep.subr.mxu0 0.0
        %670 = vmatpush1.msra.mxu0 0.0
        %671 = vmatprep.subr.mxu0 0.0
        %672 = vmatpush1.msra.mxu0 0.0
        %673 = vmatprep.subr.mxu0 0.0
        %674 = vmatpush1.msra.mxu0 0.0
        %675 = vmatprep.subr.mxu0 0.0
        %676 = vmatpush1.msra.mxu0 0.0
        %677 = vmatprep.subr.mxu0 0.0
        %678 = vmatpush1.msra.mxu0 0.0
        %679 = vmatprep.subr.mxu0 0.0
        %680 = vmatpush1.msra.mxu0 0.0
        %681 = vmatprep.subr.mxu0 0.0
        %682 = vmatpush1.msra.mxu0 0.0
        %683 = vmatprep.subr.mxu0 0.0
        %684 = vmatpush1.msra.mxu0 0.0
        %685 = vmatprep.subr.mxu0 0.0
        %686 = vmatpush1.msra.mxu0 0.0
        %687 = vmatprep.subr.mxu0 0.0
        %688 = vmatpush1.msra.mxu0 0.0
        %689 = vmatprep.mubr.f32.mxu0 0.0
        %690 = vmatmul.mubr.f32.gmra.mrb[0].mxu0 %v602
        %v691 = vpop.f32.mrb[0].mxu0
        %v692 = vadd.f32 0.0, %v691
        %v693 = vpop.f32.mrb[0].mxu0
        %v694 = vadd.f32 0.0, %v693
        %695 = vmatprep.mubr.f32.mxu0 0.0
        %696 = vmatmul.mubr.f32.gmra.mrb[0].mxu0 %v605
        %v697 = vpop.f32.mrb[0].mxu0
        %v698 = vadd.f32 0.0, %v697
        %v699 = vpop.f32.mrb[0].mxu0
        %v700 = vadd.f32 0.0, %v699
        %701 = vmatprep.mubr.f32.mxu0 0.0
        %702 = vmatmul.mubr.f32.gmra.mrb[0].mxu0 %v608
        %v703 = vpop.f32.mrb[0].mxu0
        %v704 = vadd.f32 0.0, %v703
        %v705 = vpop.f32.mrb[0].mxu0
        %v706 = vadd.f32 0.0, %v705
        %707 = vmatprep.mubr.f32.mxu0 0.0
        %708 = vmatmul.mubr.f32.gmra.mrb[0].mxu0 %v611
        %v709 = vpop.f32.mrb[0].mxu0
        %v710 = vadd.f32 0.0, %v709
        %v711 = vpop.f32.mrb[0].mxu0
        %v712 = vadd.f32 0.0, %v711
        %713 = vmatprep.mubr.f32.mxu0 0.0
        %714 = vmatmul.mubr.f32.gmra.mrb[0].mxu0 %v614
        %v715 = vpop.f32.mrb[0].mxu0
        %v716 = vadd.f32 0.0, %v715
        %v717 = vpop.f32.mrb[0].mxu0
        %v718 = vadd.f32 0.0, %v717
        %719 = vmatprep.mubr.f32.mxu0 0.0
        %720 = vmatmul.mubr.f32.gmra.mrb[0].mxu0 %v617
        %v721 = vpop.f32.mrb[0].mxu0
        %v722 = vadd.f32 0.0, %v721
        %v723 = vpop.f32.mrb[0].mxu0
        %v724 = vadd.f32 0.0, %v723
        %725 = vmatprep.mubr.f32.mxu0 0.0
        %726 = vmatmul.mubr.f32.gmra.mrb[0].mxu0 %v620
        %v727 = vpop.f32.mrb[0].mxu0
        %v728 = vadd.f32 0.0, %v727
        %v729 = vpop.f32.mrb[0].mxu0
        %v730 = vadd.f32 0.0, %v729
        %731 = vmatprep.mubr.f32.mxu0 0.0
        %732 = vmatmul.mubr.f32.gmra.mrb[0].mxu0 %v623
        %v733 = vpop.f32.mrb[0].mxu0
        %v734 = vadd.f32 0.0, %v733
        %v735 = vpop.f32.mrb[0].mxu0
        %v736 = vadd.f32 0.0, %v735
        %737 = vdwg.mxu0
        %738 = vmatprep.subr.mxu0 %v571
        %739 = vmatpush1.msra.mxu0 %v570
        %740 = vmatprep.subr.mxu0 %v575
        %741 = vmatpush1.msra.mxu0 %v574
        %742 = vmatprep.subr.mxu0 %v579
        %743 = vmatpush1.msra.mxu0 %v578
        %744 = vmatprep.subr.mxu0 %v583
        %745 = vmatpush1.msra.mxu0 %v582
        %746 = vmatprep.subr.mxu0 %v587
        %747 = vmatpush1.msra.mxu0 %v586
        %748 = vmatprep.subr.mxu0 %v591
        %749 = vmatpush1.msra.mxu0 %v590
        %750 = vmatprep.subr.mxu0 %v595
        %751 = vmatpush1.msra.mxu0 %v594
        %752 = vmatprep.subr.mxu0 %v599
        %753 = vmatpush1.msra.mxu0 %v598
        %754 = vmatprep.subr.mxu0 0.0
        %755 = vmatpush1.msra.mxu0 0.0
        %756 = vmatprep.subr.mxu0 0.0
        %757 = vmatpush1.msra.mxu0 0.0
        %758 = vmatprep.subr.mxu0 0.0
        %759 = vmatpush1.msra.mxu0 0.0
        %760 = vmatprep.subr.mxu0 0.0
        %761 = vmatpush1.msra.mxu0 0.0
        %762 = vmatprep.subr.mxu0 0.0
        %763 = vmatpush1.msra.mxu0 0.0
        %764 = vmatprep.subr.mxu0 0.0
        %765 = vmatpush1.msra.mxu0 0.0
        %766 = vmatprep.subr.mxu0 0.0
        %767 = vmatpush1.msra.mxu0 0.0
        %768 = vmatprep.subr.mxu0 0.0
        %769 = vmatpush1.msra.mxu0 0.0
        %770 = vmatprep.subr.mxu0 0.0
        %771 = vmatpush1.msra.mxu0 0.0
        %772 = vmatprep.subr.mxu0 0.0
        %773 = vmatpush1.msra.mxu0 0.0
        %774 = vmatprep.subr.mxu0 0.0
        %775 = vmatpush1.msra.mxu0 0.0
        %776 = vmatprep.subr.mxu0 0.0
        %777 = vmatpush1.msra.mxu0 0.0
        %778 = vmatprep.subr.mxu0 0.0
        %779 = vmatpush1.msra.mxu0 0.0
        %780 = vmatprep.subr.mxu0 0.0
        %781 = vmatpush1.msra.mxu0 0.0
        %782 = vmatprep.subr.mxu0 0.0
        %783 = vmatpush1.msra.mxu0 0.0
        %784 = vmatprep.subr.mxu0 0.0
        %785 = vmatpush1.msra.mxu0 0.0
        %786 = vmatprep.subr.mxu0 0.0
        %787 = vmatpush1.msra.mxu0 0.0
        %788 = vmatprep.subr.mxu0 0.0
        %789 = vmatpush1.msra.mxu0 0.0
        %790 = vmatprep.subr.mxu0 0.0
        %791 = vmatpush1.msra.mxu0 0.0
        %792 = vmatprep.subr.mxu0 0.0
        %793 = vmatpush1.msra.mxu0 0.0
        %794 = vmatprep.subr.mxu0 0.0
        %795 = vmatpush1.msra.mxu0 0.0
        %796 = vmatprep.subr.mxu0 0.0
        %797 = vmatpush1.msra.mxu0 0.0
        %798 = vmatprep.subr.mxu0 0.0
        %799 = vmatpush1.msra.mxu0 0.0
        %800 = vmatprep.subr.mxu0 0.0
        %801 = vmatpush1.msra.mxu0 0.0
        %802 = vmatprep.mubr.f32.mxu0 0.0
        %803 = vmatmul.mubr.f32.gmra.mrb[0].mxu0 %v602
        %v804 = vpop.f32.mrb[0].mxu0
        %v805 = vadd.f32 0.0, %v804
        %v806 = vpop.f32.mrb[0].mxu0
        %v807 = vadd.f32 0.0, %v806
        %808 = vmatprep.mubr.f32.mxu0 0.0
        %809 = vmatmul.mubr.f32.gmra.mrb[0].mxu0 %v605
        %v810 = vpop.f32.mrb[0].mxu0
        %v811 = vadd.f32 0.0, %v810
        %v812 = vpop.f32.mrb[0].mxu0
        %v813 = vadd.f32 0.0, %v812
        %814 = vmatprep.mubr.f32.mxu0 0.0
        %815 = vmatmul.mubr.f32.gmra.mrb[0].mxu0 %v608
        %v816 = vpop.f32.mrb[0].mxu0
        %v817 = vadd.f32 0.0, %v816
        %v818 = vpop.f32.mrb[0].mxu0
        %v819 = vadd.f32 0.0, %v818
        %820 = vmatprep.mubr.f32.mxu0 0.0
        %821 = vmatmul.mubr.f32.gmra.mrb[0].mxu0 %v611
        %v822 = vpop.f32.mrb[0].mxu0
        %v823 = vadd.f32 0.0, %v822
        %v824 = vpop.f32.mrb[0].mxu0
        %v825 = vadd.f32 0.0, %v824
        %826 = vmatprep.mubr.f32.mxu0 0.0
        %827 = vmatmul.mubr.f32.gmra.mrb[0].mxu0 %v614
        %v828 = vpop.f32.mrb[0].mxu0
        %v829 = vadd.f32 0.0, %v828
        %v830 = vpop.f32.mrb[0].mxu0
        %v831 = vadd.f32 0.0, %v830
        %832 = vmatprep.mubr.f32.mxu0 0.0
        %833 = vmatmul.mubr.f32.gmra.mrb[0].mxu0 %v617
        %v834 = vpop.f32.mrb[0].mxu0
        %v835 = vadd.f32 0.0, %v834
        %v836 = vpop.f32.mrb[0].mxu0
        %v837 = vadd.f32 0.0, %v836
        %838 = vmatprep.mubr.f32.mxu0 0.0
        %839 = vmatmul.mubr.f32.gmra.mrb[0].mxu0 %v620
        %v840 = vpop.f32.mrb[0].mxu0
        %v841 = vadd.f32 0.0, %v840
        %v842 = vpop.f32.mrb[0].mxu0
        %v843 = vadd.f32 0.0, %v842
        %844 = vmatprep.mubr.f32.mxu0 0.0
        %845 = vmatmul.mubr.f32.gmra.mrb[0].mxu0 %v623
        %v846 = vpop.f32.mrb[0].mxu0
        %v847 = vadd.f32 0.0, %v846
        %v848 = vpop.f32.mrb[0].mxu0
        %v849 = vadd.f32 0.0, %v848
        %850 = vdwg.mxu0
        %v851 = vmax.f32 %v692, 0.0
        %v852 = vmax.f32 %v694, 0.0
        %v853 = vmax.f32 %v805, 0.0
        %v854 = vmax.f32 %v807, 0.0
        %v855 = vmax.f32 %v698, 0.0
        %v856 = vmax.f32 %v700, 0.0
        %v857 = vmax.f32 %v811, 0.0
        %v858 = vmax.f32 %v813, 0.0
        %v859 = vmax.f32 %v704, 0.0
        %v860 = vmax.f32 %v706, 0.0
        %v861 = vmax.f32 %v817, 0.0
        %v862 = vmax.f32 %v819, 0.0
        %v863 = vmax.f32 %v710, 0.0
        %v864 = vmax.f32 %v712, 0.0
        %v865 = vmax.f32 %v823, 0.0
        %v866 = vmax.f32 %v825, 0.0
        %v867 = vmax.f32 %v716, 0.0
        %v868 = vmax.f32 %v718, 0.0
        %v869 = vmax.f32 %v829, 0.0
        %v870 = vmax.f32 %v831, 0.0
        %v871 = vmax.f32 %v722, 0.0
        %v872 = vmax.f32 %v724, 0.0
        %v873 = vmax.f32 %v835, 0.0
        %v874 = vmax.f32 %v837, 0.0
        %v875 = vmax.f32 %v728, 0.0
        %v876 = vmax.f32 %v730, 0.0
        %v877 = vmax.f32 %v841, 0.0
        %v878 = vmax.f32 %v843, 0.0
        %v879 = vmax.f32 %v734, 0.0
        %v880 = vmax.f32 %v736, 0.0
        %v881 = vmax.f32 %v847, 0.0
        %v882 = vmax.f32 %v849, 0.0
        %883 = vst [vmem:[%s245] sm:$0xff] %v851
        %884 = vst [vmem:[%s245 + $0x8] sm:$0xff] %v855
        %885 = vst [vmem:[%s245 + $0x10] sm:$0xff] %v859
        %886 = vst [vmem:[%s245 + $0x18] sm:$0xff] %v863
        %887 = vst [vmem:[%s245 + $0x20] sm:$0xff] %v867
        %888 = vst [vmem:[%s245 + $0x28] sm:$0xff] %v871
        %889 = vst [vmem:[%s245 + $0x30] sm:$0xff] %v875
        %890 = vst [vmem:[%s245 + $0x38] sm:$0xff] %v879
        %s891 = scalar_lea.vmem %s245, 64 [#allocation9]
        %892 = vst [vmem:[%s891] sm:$0xff] %v852
        %893 = vst [vmem:[%s891 + $0x8] sm:$0xff] %v856
        %894 = vst [vmem:[%s891 + $0x10] sm:$0xff] %v860
        %895 = vst [vmem:[%s891 + $0x18] sm:$0xff] %v864
        %896 = vst [vmem:[%s891 + $0x20] sm:$0xff] %v868
        %897 = vst [vmem:[%s891 + $0x28] sm:$0xff] %v872
        %898 = vst [vmem:[%s891 + $0x30] sm:$0xff] %v876
        %899 = vst [vmem:[%s891 + $0x38] sm:$0xff] %v880
        %s900 = scalar_lea.vmem %s245, 128 [#allocation9]
        %901 = vst [vmem:[%s900] sm:$0xff] %v853
        %902 = vst [vmem:[%s900 + $0x8] sm:$0xff] %v857
        %903 = vst [vmem:[%s900 + $0x10] sm:$0xff] %v861
        %904 = vst [vmem:[%s900 + $0x18] sm:$0xff] %v865
        %905 = vst [vmem:[%s900 + $0x20] sm:$0xff] %v869
        %906 = vst [vmem:[%s900 + $0x28] sm:$0xff] %v873
        %907 = vst [vmem:[%s900 + $0x30] sm:$0xff] %v877
        %908 = vst [vmem:[%s900 + $0x38] sm:$0xff] %v881
        %s909 = scalar_lea.vmem %s245, 192 [#allocation9]
        %910 = vst [vmem:[%s909] sm:$0xff] %v854
        %911 = vst [vmem:[%s909 + $0x8] sm:$0xff] %v858
        %912 = vst [vmem:[%s909 + $0x10] sm:$0xff] %v862
        %913 = vst [vmem:[%s909 + $0x18] sm:$0xff] %v866
        %914 = vst [vmem:[%s909 + $0x20] sm:$0xff] %v870
        %915 = vst [vmem:[%s909 + $0x28] sm:$0xff] %v874
        %916 = vst [vmem:[%s909 + $0x30] sm:$0xff] %v878
        %917 = vst [vmem:[%s909 + $0x38] sm:$0xff] %v882
        %s918 = sand.u32 %s119, 1
        %s919 = scalar_lea.sflag [#allocation5], %s918
        %s920 = sand.u32 %s119, 1
        %s921 = smul.addr %s920, 256
        %s922 = scalar_lea.vmem [#allocation9], %s921
        // Predicated region
        $region49: #{tpu_custom_call.1} parent=35 // pred_check
          %p923 = pneg %p129
        $region50: #{tpu_custom_call.1} parent=35 // pred_check_branch
          %925 = sbr.rel (%p923) target = $region52
        $region51: #{tpu_custom_call.1} parent=35 // pred_region
          %s926 = smul.u32 4, %s22
          %s928 = ssub.s32 4096, 4096
          %929 = vsyncadd %s919, %s928
          %s930 = smul.addr %s926, 8
          %s931 = smul.addr %s930, 128
          %s932 = scalar_lea.hbm %s4, %s931
          %s933 = sshll.u32 %s922, 4
          %s934 = int_to_ptr.vmem [resolvable:$true] %s933
          %939 = dma.vmem_to_hbm [thread:$0]  %s934, 4096, %s932, %s919, 128, 128, 8
        $region52: #{tpu_custom_call.1} parent=35 // pred_fallthru
          _
      $region36: #{tpu_custom_call.1} parent=5 // pred_fallthru
        _
      %p940 = scmp.le.s32.totalorder 2, %s17
      // Predicated region
      $region53: #{tpu_custom_call.1} parent=5 // pred_check
        %p941 = pneg %p940
      $region54: #{tpu_custom_call.1} parent=5 // pred_check_branch
        %943 = sbr.rel (%p941) target = $region56
      $region55: #{tpu_custom_call.1} parent=5 // pred_region
        %s944 = ssub.s32 %s17, 2
        // Predicated region
        $region57: #{tpu_custom_call.1} parent=55 // pred_check
          %p945 = pneg %p135
        $region58: #{tpu_custom_call.1} parent=55 // pred_check_branch
          %947 = sbr.rel (%p945) target = $region60
        $region59: #{tpu_custom_call.1} parent=55 // pred_region
          %s948 = sand.u32 %s120, 1
          %s949 = scalar_lea.sflag [#allocation5], %s948
          %s950 = sand.u32 %s120, 1
          %s951 = smul.addr %s950, 256
          %s952 = scalar_lea.vmem [#allocation9], %s951
          %953 = dma.done %s949, 4096
        $region60: #{tpu_custom_call.1} parent=55 // pred_fallthru
          _
      $region56: #{tpu_custom_call.1} parent=5 // pred_fallthru
        _
    $region6: #{tpu_custom_call.1} parent=1 // loop_footer
      %s21 = sadd.s32 1, %s17
    $region7: #{tpu_custom_call.1} parent=1 // loop_footer_branch
      %16 = sbr.rel target = $region3
    $region8: #{tpu_custom_call.1} parent=1 // loop_exit
      _
    %954 = vsyncpa [#allocation4], 1
    %s955 = scalar_lea.sflag [#allocation4], 1
    %956 = vsyncpa %s955, 1
    %957 = vsyncpa [#allocation7], 1
    %958 = vsyncpa [#allocation5], 1
    %s959 = scalar_lea.sflag [#allocation5], 1
    %960 = vsyncpa %s959, 1

</llo_original>
